<compile_context>
chip_gen: v5e
topology: v5e:2x2
jax: 0.10.0
libtpu: 0.0.40
codegen_flags: <defaults>
</compile_context>

<pallas_src>
import functools
import math

import jax
import jax.numpy as jnp
from jax.experimental import pallas as pl
from jax.experimental.pallas import tpu as pltpu

STATE_SIZE = 33
ACTION_SIZE = 4
FC1_UNITS = 256
FC2_UNITS = 128

OUT_W = 8              # packed lanes: action[0:4] | log_prob[4] | entropy[5] | pad[6:8]
MAX_BATCH_TILE = 2048  # double-buffered (TB,33)+(TB,8)x2 + intermediates << VMEM

_LOG_2PI = math.log(2.0 * math.pi)


def _round_up(n, m):
    return ((n + m - 1) // m) * m


def _cdiv(a, b):
    return -(-a // b)


def _policy_kernel(sample_action: bool,
                   state_ref, w1_ref, b1_ref, w2_ref, b2_ref, w3_ref, b3_ref,
                   aux_ref, act_or_noise_ref, out_ref):
    tb = out_ref.shape[0]

    # ---- MLP trunk: bf16 MXU matmuls with f32 accumulation ------------------
    x = state_ref[...].astype(jnp.bfloat16)                           # (TB, 33)
    h1 = jnp.maximum(
        jnp.dot(x, w1_ref[...], preferred_element_type=jnp.float32)
        + b1_ref[...], 0.0)                                            # (TB, 256)
    h2 = jnp.maximum(
        jnp.dot(h1.astype(jnp.bfloat16), w2_ref[...],
                preferred_element_type=jnp.float32)
        + b2_ref[...], 0.0)                                            # (TB, 128)
    z = jnp.dot(h2.astype(jnp.bfloat16), w3_ref[...],
                preferred_element_type=jnp.float32) + b3_ref[...]      # (TB, 8)
    # torch: tanh(relu(fc3(x))).  Padded lanes 4:8 stay exactly 0.
    mean = jnp.tanh(jnp.maximum(z, 0.0))                               # (TB, 8)

    # ---- batch-independent scalars, precomputed in the wrapper --------------
    aux = aux_ref[...]                     # (8, 8) f32
    std_row = aux[0:1, :]                  # softplus(std);            0 in pad lanes
    inv_var_row = aux[1:2, :]              # 1 / std^2 (exact);        0 in pad lanes
    const_row = aux[2:3, :]                # -(log_std + log(2*pi)/2); 0 in pad lanes
    ent = aux[3:4, 0:1]                    # summed entropy scalar

    if sample_action:
        # act_or_noise holds standard-normal noise -> reparameterized sample.
        action = mean + std_row * act_or_noise_ref[...]                # (TB, 8)
    else:
        action = act_or_noise_ref[...]                                 # (TB, 8)

    # Normal log-prob summed over action lanes (pad lanes contribute exactly 0).
    diff = action - mean
    logp = jnp.sum(-0.5 * (diff * diff) * inv_var_row + const_row,
                   axis=1, keepdims=True)                              # (TB, 1)

    # ---- packed epilogue: full-tile store + two narrow lane overwrites ------
    out_ref[...] = action
    out_ref[:, ACTION_SIZE:ACTION_SIZE + 1] = logp
    out_ref[:, ACTION_SIZE + 1:ACTION_SIZE + 2] = jnp.broadcast_to(ent, (tb, 1))


def policy_forward(params, state, action=None, *, rng=None,
                   batch_tile=MAX_BATCH_TILE):
    """Runs the Policy forward pass. If `action` is None, samples from
    Normal(mean, softplus(std)) using `rng` (noise drawn in JAX, combined in
    the kernel via the reparameterization trick)."""
    state = jnp.asarray(state, jnp.float32)
    B = state.shape[0]
    sample = action is None
    if sample:
        if rng is None:
            raise ValueError("rng is required when sampling (action=None)")
        act_in = jax.random.normal(rng, (B, ACTION_SIZE), jnp.float32)
    else:
        act_in = jnp.asarray(action, jnp.float32)

    # ---- tile / grid selection (minimize padding, >=2 tiles for v7x) --------
    n_tiles = _cdiv(B, batch_tile)
    if n_tiles < 2 and B >= 256:
        n_tiles = 2                       # give both v7x TensorCores work
    TB = _round_up(_cdiv(B, n_tiles), 8)
    Bp = TB * n_tiles

    state_p = state if Bp == B else jnp.pad(state, ((0, Bp - B), (0, 0)))
    act_p = jnp.pad(act_in, ((0, Bp - B), (0, OUT_W - ACTION_SIZE)))

    # ---- parameters (bf16 weights; fc3 padded to OUT_W lanes) ---------------
    w1 = jnp.asarray(params["w1"], jnp.bfloat16)
    w2 = jnp.asarray(params["w2"], jnp.bfloat16)
    w3 = jnp.asarray(params["w3"], jnp.bfloat16)
    b1 = jnp.asarray(params["b1"], jnp.float32).reshape(1, FC1_UNITS)
    b2 = jnp.asarray(params["b2"], jnp.float32).reshape(1, FC2_UNITS)
    b3 = jnp.asarray(params["b3"], jnp.float32).reshape(1, -1)
    if w3.shape[1] != OUT_W:
        w3 = jnp.pad(w3, ((0, 0), (0, OUT_W - w3.shape[1])))
    if b3.shape[1] != OUT_W:
        b3 = jnp.pad(b3, ((0, 0), (0, OUT_W - b3.shape[1])))

    # ---- batch-independent distribution scalars (hoisted out of the kernel) -
    std_param = jnp.asarray(params["std"], jnp.float32).reshape(1, ACTION_SIZE)
    std = jax.nn.softplus(std_param)                       # (1, 4)
    log_std = jnp.log(std)
    inv_var = 1.0 / (std * std)                            # exact
    const = -(log_std + 0.5 * _LOG_2PI)
    entropy = jnp.sum(0.5 + 0.5 * _LOG_2PI + log_std)      # scalar
    aux = jnp.zeros((8, OUT_W), jnp.float32)
    aux = aux.at[0, :ACTION_SIZE].set(std[0])
    aux = aux.at[1, :ACTION_SIZE].set(inv_var[0])
    aux = aux.at[2, :ACTION_SIZE].set(const[0])
    aux = aux.at[3, :].set(entropy)

    grid = (n_tiles,)
    in_specs = [
        pl.BlockSpec((TB, STATE_SIZE), lambda i: (i, 0)),           # state (tiled)
        pl.BlockSpec((STATE_SIZE, FC1_UNITS), lambda i: (0, 0)),    # w1 (resident)
        pl.BlockSpec((1, FC1_UNITS), lambda i: (0, 0)),             # b1
        pl.BlockSpec((FC1_UNITS, FC2_UNITS), lambda i: (0, 0)),     # w2
        pl.BlockSpec((1, FC2_UNITS), lambda i: (0, 0)),             # b2
        pl.BlockSpec((FC2_UNITS, OUT_W), lambda i: (0, 0)),         # w3 (padded)
        pl.BlockSpec((1, OUT_W), lambda i: (0, 0)),                 # b3 (padded)
        pl.BlockSpec((8, OUT_W), lambda i: (0, 0)),                 # aux scalars
        pl.BlockSpec((TB, OUT_W), lambda i: (i, 0)),                # action / noise
    ]
    out_specs = pl.BlockSpec((TB, OUT_W), lambda i: (i, 0))         # packed output
    out_shape = jax.ShapeDtypeStruct((Bp, OUT_W), jnp.float32)

    cost = pl.CostEstimate(
        flops=2 * Bp * (STATE_SIZE * FC1_UNITS
                        + FC1_UNITS * FC2_UNITS
                        + FC2_UNITS * OUT_W),
        transcendentals=Bp * OUT_W,  # tanh
        bytes_accessed=(2 * (STATE_SIZE * FC1_UNITS + FC1_UNITS * FC2_UNITS
                             + FC2_UNITS * OUT_W)                   # bf16 weights
                        + 4 * (FC1_UNITS + FC2_UNITS + OUT_W + 8 * OUT_W)
                        + 4 * Bp * (STATE_SIZE + 2 * OUT_W)),
    )

    kernel = functools.partial(_policy_kernel, sample)
    packed = pl.pallas_call(
        kernel,
        out_shape=out_shape,
        grid=grid,
        in_specs=in_specs,
        out_specs=out_specs,
        compiler_params=pltpu.CompilerParams(
            dimension_semantics=("parallel",)),
        cost_estimate=cost,
    )(state_p, w1, b1, w2, b2, w3, b3, aux, act_p)

    action_out = packed[:B, 0:ACTION_SIZE]
    log_prob = packed[:B, ACTION_SIZE:ACTION_SIZE + 1]
    entropy_out = packed[:B, ACTION_SIZE + 1:ACTION_SIZE + 2]
    return action_out, log_prob, entropy_out


def init_params(seed=0):
    """Deterministic parameter init mirroring the module's reset_parameters():
    fc1/fc2 weights ~ U(-1/sqrt(out_features), ...) (the original torch code
    uses weight.size()[0] == out_features as 'fan_in'), fc3 ~ U(-3e-3, 3e-3),
    biases use default PyTorch Linear init U(-1/sqrt(in), 1/sqrt(in)),
    std param = zeros(1, action_size).  Weights stored as (in, out), bf16;
    fc3 weight/bias pre-padded to OUT_W output lanes (zero columns)."""
    key = jax.random.PRNGKey(seed)
    ks = jax.random.split(key, 6)

    lim1 = 1.0 / math.sqrt(FC1_UNITS)
    lim2 = 1.0 / math.sqrt(FC2_UNITS)

    w1 = jax.random.uniform(ks[0], (STATE_SIZE, FC1_UNITS), jnp.float32, -lim1, lim1)
    w2 = jax.random.uniform(ks[1], (FC1_UNITS, FC2_UNITS), jnp.float32, -lim2, lim2)
    w3 = jax.random.uniform(ks[2], (FC2_UNITS, ACTION_SIZE), jnp.float32, -3e-3, 3e-3)

    b1 = jax.random.uniform(ks[3], (1, FC1_UNITS), jnp.float32,
                            -1.0 / math.sqrt(STATE_SIZE), 1.0 / math.sqrt(STATE_SIZE))
    b2 = jax.random.uniform(ks[4], (1, FC2_UNITS), jnp.float32,
                            -1.0 / math.sqrt(FC1_UNITS), 1.0 / math.sqrt(FC1_UNITS))
    b3 = jax.random.uniform(ks[5], (1, ACTION_SIZE), jnp.float32,
                            -1.0 / math.sqrt(FC2_UNITS), 1.0 / math.sqrt(FC2_UNITS))

    w3_p = jnp.pad(w3, ((0, 0), (0, OUT_W - ACTION_SIZE)))
    b3_p = jnp.pad(b3, ((0, 0), (0, OUT_W - ACTION_SIZE)))
    std = jnp.zeros((1, ACTION_SIZE), jnp.float32)
    return {"w1": w1.astype(jnp.bfloat16), "b1": b1,
            "w2": w2.astype(jnp.bfloat16), "b2": b2,
            "w3": w3_p.astype(jnp.bfloat16), "b3": b3_p,
            "std": std}


def _policy_reference(params, state, action_or_noise, sample):
    """Pure-JAX reference of the same forward for tolerance checking."""
    w1 = jnp.asarray(params["w1"], jnp.float32)
    w2 = jnp.asarray(params["w2"], jnp.float32)
    w3 = jnp.asarray(params["w3"], jnp.float32)[:, :ACTION_SIZE]
    b3 = jnp.asarray(params["b3"], jnp.float32).reshape(1, -1)[:, :ACTION_SIZE]
    h1 = jax.nn.relu(state @ w1 + params["b1"])
    h2 = jax.nn.relu(h1 @ w2 + params["b2"])
    mean = jnp.tanh(jax.nn.relu(h2 @ w3 + b3))
    std = jax.nn.softplus(params["std"])
    action = mean + std * action_or_noise if sample else action_or_noise
    logp = jnp.sum(-0.5 * ((action - mean) / std) ** 2 - jnp.log(std)
                   - 0.5 * _LOG_2PI, axis=1, keepdims=True)
    ent = jnp.sum(jnp.broadcast_to(0.5 + 0.5 * _LOG_2PI + jnp.log(std), mean.shape),
                  axis=1, keepdims=True)
    return action, logp, ent


if __name__ == "__main__":
    key = jax.random.PRNGKey(0)
    k_state, k_noise, k_act = jax.random.split(key, 3)

    B = 8
    params = init_params(seed=0)
    state = jax.random.normal(k_state, (B, STATE_SIZE), jnp.float32)

    # Path 1: action=None -> sample inside the kernel (noise drawn in JAX).
    action, log_prob, entropy = policy_forward(params, state, action=None, rng=k_noise)
    jax.block_until_ready((action, log_prob, entropy))
    assert action.shape == (B, ACTION_SIZE)
    assert log_prob.shape == (B, 1)
    assert entropy.shape == (B, 1)

    # Tolerance check of the sampling path (same noise as inside the wrapper).
    noise = jax.random.normal(k_noise, (B, ACTION_SIZE), jnp.float32)
    ref_a, ref_lp, ref_ent = _policy_reference(params, state, noise, sample=True)
    assert bool(jnp.allclose(action, ref_a, rtol=1e-2, atol=1e-2))
    assert bool(jnp.allclose(log_prob, ref_lp, rtol=1e-2, atol=1e-2))
    assert bool(jnp.allclose(entropy, ref_ent, rtol=1e-2, atol=1e-2))

    # Path 2: explicit action -> evaluate log_prob / entropy of given action.
    given = jax.random.normal(k_act, (B, ACTION_SIZE), jnp.float32)
    action2, log_prob2, entropy2 = policy_forward(params, state, action=given)
    jax.block_until_ready((action2, log_prob2, entropy2))
    assert bool(jnp.allclose(action2, given))

    ref_a2, ref_lp2, ref_ent2 = _policy_reference(params, state, given, sample=False)
    assert bool(jnp.allclose(log_prob2, ref_lp2, rtol=1e-2, atol=1e-2))
    assert bool(jnp.allclose(entropy2, ref_ent2, rtol=1e-2, atol=1e-2))

    print("KERNEL_OK")
</pallas_src>

<mosaic_0001>
module attributes {stable_mosaic.version = 11 : i64} {
  func.func @_policy_kernel(%arg0: i32, %arg1: memref<8x33xf32, #tpu.memory_space<vmem>>, %arg2: memref<33x256xbf16, #tpu.memory_space<vmem>>, %arg3: memref<1x256xf32, #tpu.memory_space<vmem>>, %arg4: memref<256x128xbf16, #tpu.memory_space<vmem>>, %arg5: memref<1x128xf32, #tpu.memory_space<vmem>>, %arg6: memref<128x8xbf16, #tpu.memory_space<vmem>>, %arg7: memref<1x8xf32, #tpu.memory_space<vmem>>, %arg8: memref<8x8xf32, #tpu.memory_space<vmem>>, %arg9: memref<8x8xf32, #tpu.memory_space<vmem>>, %arg10: memref<8x8xf32, #tpu.memory_space<vmem>>) attributes {dimension_semantics = [#tpu.dimension_semantics<parallel>], iteration_bounds = array<i64: 1>, scalar_prefetch = 0 : i64, scratch_operands = 0 : i64, tpu.core_type = #tpu.core_type<tc>, window_params = [{transform_indices = @transform_0, window_bounds = array<i64: 8, 33>}, {pipeline_mode = #tpu.pipeline_mode<synchronous>, transform_indices = @transform_1, window_bounds = array<i64: 33, 256>}, {pipeline_mode = #tpu.pipeline_mode<synchronous>, transform_indices = @transform_2, window_bounds = array<i64: 1, 256>}, {pipeline_mode = #tpu.pipeline_mode<synchronous>, transform_indices = @transform_3, window_bounds = array<i64: 256, 128>}, {pipeline_mode = #tpu.pipeline_mode<synchronous>, transform_indices = @transform_4, window_bounds = array<i64: 1, 128>}, {pipeline_mode = #tpu.pipeline_mode<synchronous>, transform_indices = @transform_5, window_bounds = array<i64: 128, 8>}, {pipeline_mode = #tpu.pipeline_mode<synchronous>, transform_indices = @transform_6, window_bounds = array<i64: 1, 8>}, {pipeline_mode = #tpu.pipeline_mode<synchronous>, transform_indices = @transform_7, window_bounds = array<i64: 8, 8>}, {transform_indices = @transform_8, window_bounds = array<i64: 8, 8>}, {transform_indices = @transform_9, window_bounds = array<i64: 8, 8>}]} {
    %c0 = arith.constant 0 : index
    %c0_0 = arith.constant 0 : index
    %0 = vector.load %arg1[%c0, %c0_0] : memref<8x33xf32, #tpu.memory_space<vmem>>, vector<8x33xf32>
    %1 = arith.truncf %0 : vector<8x33xf32> to vector<8x33xbf16>
    %c0_1 = arith.constant 0 : index
    %c0_2 = arith.constant 0 : index
    %2 = vector.load %arg2[%c0_1, %c0_2] : memref<33x256xbf16, #tpu.memory_space<vmem>>, vector<33x256xbf16>
    %cst = arith.constant dense<0.000000e+00> : vector<8x256xf32>
    %3 = tpu.matmul %1, %2, %cst {dimension_numbers = #tpu.dot_dimension_numbers<[1], [0], [0], [1], [0, 0, 1, 1], [], []>} : vector<8x33xbf16>, vector<33x256xbf16>, vector<8x256xf32> -> vector<8x256xf32>
    %c0_3 = arith.constant 0 : index
    %c0_4 = arith.constant 0 : index
    %4 = vector.load %arg3[%c0_3, %c0_4] : memref<1x256xf32, #tpu.memory_space<vmem>>, vector<1x256xf32>
    %5 = vector.broadcast %4 : vector<1x256xf32> to vector<8x256xf32>
    %6 = arith.addf %3, %5 : vector<8x256xf32>
    %cst_5 = arith.constant 0.000000e+00 : f32
    %7 = vector.broadcast %cst_5 : f32 to vector<8x256xf32>
    %8 = arith.maximumf %6, %7 : vector<8x256xf32>
    %9 = arith.truncf %8 : vector<8x256xf32> to vector<8x256xbf16>
    %c0_6 = arith.constant 0 : index
    %c0_7 = arith.constant 0 : index
    %10 = vector.load %arg4[%c0_6, %c0_7] : memref<256x128xbf16, #tpu.memory_space<vmem>>, vector<256x128xbf16>
    %cst_8 = arith.constant dense<0.000000e+00> : vector<8x128xf32>
    %11 = tpu.matmul %9, %10, %cst_8 {dimension_numbers = #tpu.dot_dimension_numbers<[1], [0], [0], [1], [0, 0, 1, 1], [], []>} : vector<8x256xbf16>, vector<256x128xbf16>, vector<8x128xf32> -> vector<8x128xf32>
    %c0_9 = arith.constant 0 : index
    %c0_10 = arith.constant 0 : index
    %12 = vector.load %arg5[%c0_9, %c0_10] : memref<1x128xf32, #tpu.memory_space<vmem>>, vector<1x128xf32>
    %13 = vector.broadcast %12 : vector<1x128xf32> to vector<8x128xf32>
    %14 = arith.addf %11, %13 : vector<8x128xf32>
    %cst_11 = arith.constant 0.000000e+00 : f32
    %15 = vector.broadcast %cst_11 : f32 to vector<8x128xf32>
    %16 = arith.maximumf %14, %15 : vector<8x128xf32>
    %17 = arith.truncf %16 : vector<8x128xf32> to vector<8x128xbf16>
    %c0_12 = arith.constant 0 : index
    %c0_13 = arith.constant 0 : index
    %18 = vector.load %arg6[%c0_12, %c0_13] : memref<128x8xbf16, #tpu.memory_space<vmem>>, vector<128x8xbf16>
    %cst_14 = arith.constant dense<0.000000e+00> : vector<8x8xf32>
    %19 = tpu.matmul %17, %18, %cst_14 {dimension_numbers = #tpu.dot_dimension_numbers<[1], [0], [0], [1], [0, 0, 1, 1], [], []>} : vector<8x128xbf16>, vector<128x8xbf16>, vector<8x8xf32> -> vector<8x8xf32>
    %c0_15 = arith.constant 0 : index
    %c0_16 = arith.constant 0 : index
    %20 = vector.load %arg7[%c0_15, %c0_16] : memref<1x8xf32, #tpu.memory_space<vmem>>, vector<1x8xf32>
    %21 = vector.broadcast %20 : vector<1x8xf32> to vector<8x8xf32>
    %22 = arith.addf %19, %21 : vector<8x8xf32>
    %cst_17 = arith.constant 0.000000e+00 : f32
    %23 = vector.broadcast %cst_17 : f32 to vector<8x8xf32>
    %24 = arith.maximumf %22, %23 : vector<8x8xf32>
    %25 = math.tanh %24 : vector<8x8xf32>
    %c0_18 = arith.constant 0 : index
    %c0_19 = arith.constant 0 : index
    %26 = vector.load %arg8[%c0_18, %c0_19] : memref<8x8xf32, #tpu.memory_space<vmem>>, vector<8x8xf32>
    %27 = vector.extract_strided_slice %26 {offsets = [0, 0], sizes = [1, 8], strides = [1, 1]} : vector<8x8xf32> to vector<1x8xf32>
    %28 = vector.extract_strided_slice %26 {offsets = [1, 0], sizes = [1, 8], strides = [1, 1]} : vector<8x8xf32> to vector<1x8xf32>
    %29 = vector.extract_strided_slice %26 {offsets = [2, 0], sizes = [1, 8], strides = [1, 1]} : vector<8x8xf32> to vector<1x8xf32>
    %30 = vector.extract_strided_slice %26 {offsets = [3, 0], sizes = [1, 1], strides = [1, 1]} : vector<8x8xf32> to vector<1x1xf32>
    %c0_20 = arith.constant 0 : index
    %c0_21 = arith.constant 0 : index
    %31 = vector.load %arg9[%c0_20, %c0_21] : memref<8x8xf32, #tpu.memory_space<vmem>>, vector<8x8xf32>
    %32 = vector.broadcast %27 : vector<1x8xf32> to vector<8x8xf32>
    %33 = arith.mulf %32, %31 : vector<8x8xf32>
    %34 = arith.addf %25, %33 : vector<8x8xf32>
    %35 = arith.subf %34, %25 : vector<8x8xf32>
    %36 = arith.mulf %35, %35 : vector<8x8xf32>
    %cst_22 = arith.constant -5.000000e-01 : f32
    %37 = vector.broadcast %cst_22 : f32 to vector<8x8xf32>
    %38 = arith.mulf %37, %36 : vector<8x8xf32>
    %39 = vector.broadcast %28 : vector<1x8xf32> to vector<8x8xf32>
    %40 = arith.mulf %38, %39 : vector<8x8xf32>
    %41 = vector.broadcast %29 : vector<1x8xf32> to vector<8x8xf32>
    %42 = arith.addf %40, %41 : vector<8x8xf32>
    %cst_23 = arith.constant dense<0.000000e+00> : vector<8xf32>
    %43 = vector.multi_reduction <add>, %42, %cst_23 [1] : vector<8x8xf32> to vector<8xf32>
    %44 = vector.shape_cast %43 : vector<8xf32> to vector<8x1xf32>
    %c0_24 = arith.constant 0 : index
    %c0_25 = arith.constant 0 : index
    %45 = vector.load %arg10[%c0_24, %c0_25] : memref<8x8xf32, #tpu.memory_space<vmem>>, vector<8x8xf32>
    tpu.vector_store %arg10[%c0_24, %c0_25], %34 {strides = array<i32>} : memref<8x8xf32, #tpu.memory_space<vmem>>, vector<8x8xf32>,
    %c0_26 = arith.constant 0 : index
    %c4 = arith.constant 4 : index
    %46 = vector.load %arg10[%c0_26, %c4] : memref<8x8xf32, #tpu.memory_space<vmem>>, vector<8x1xf32>
    tpu.vector_store %arg10[%c0_26, %c4], %44 {strides = array<i32>} : memref<8x8xf32, #tpu.memory_space<vmem>>, vector<8x1xf32>,
    %47 = vector.shape_cast %30 : vector<1x1xf32> to vector<1x1xf32>
    %48 = vector.broadcast %47 : vector<1x1xf32> to vector<8x1xf32>
    %c0_27 = arith.constant 0 : index
    %c5 = arith.constant 5 : index
    %49 = vector.load %arg10[%c0_27, %c5] : memref<8x8xf32, #tpu.memory_space<vmem>>, vector<8x1xf32>
    tpu.vector_store %arg10[%c0_27, %c5], %48 {strides = array<i32>} : memref<8x8xf32, #tpu.memory_space<vmem>>, vector<8x1xf32>,
    return
  }
  func.func @transform_0(%arg0: i32) -> (i32, i32) {
    %c0_i32 = arith.constant 0 : i32
    %c0_i32_0 = arith.constant 0 : i32
    return %arg0, %c0_i32 : i32, i32
  }
  func.func @transform_1(%arg0: i32) -> (i32, i32) {
    %c0_i32 = arith.constant 0 : i32
    %c0_i32_0 = arith.constant 0 : i32
    %c0_i32_1 = arith.constant 0 : i32
    return %c0_i32, %c0_i32_0 : i32, i32
  }
  func.func @transform_2(%arg0: i32) -> (i32, i32) {
    %c0_i32 = arith.constant 0 : i32
    %c0_i32_0 = arith.constant 0 : i32
    %c0_i32_1 = arith.constant 0 : i32
    return %c0_i32, %c0_i32_0 : i32, i32
  }
  func.func @transform_3(%arg0: i32) -> (i32, i32) {
    %c0_i32 = arith.constant 0 : i32
    %c0_i32_0 = arith.constant 0 : i32
    %c0_i32_1 = arith.constant 0 : i32
    return %c0_i32, %c0_i32_0 : i32, i32
  }
  func.func @transform_4(%arg0: i32) -> (i32, i32) {
    %c0_i32 = arith.constant 0 : i32
    %c0_i32_0 = arith.constant 0 : i32
    %c0_i32_1 = arith.constant 0 : i32
    return %c0_i32, %c0_i32_0 : i32, i32
  }
  func.func @transform_5(%arg0: i32) -> (i32, i32) {
    %c0_i32 = arith.constant 0 : i32
    %c0_i32_0 = arith.constant 0 : i32
    %c0_i32_1 = arith.constant 0 : i32
    return %c0_i32, %c0_i32_0 : i32, i32
  }
  func.func @transform_6(%arg0: i32) -> (i32, i32) {
    %c0_i32 = arith.constant 0 : i32
    %c0_i32_0 = arith.constant 0 : i32
    %c0_i32_1 = arith.constant 0 : i32
    return %c0_i32, %c0_i32_0 : i32, i32
  }
  func.func @transform_7(%arg0: i32) -> (i32, i32) {
    %c0_i32 = arith.constant 0 : i32
    %c0_i32_0 = arith.constant 0 : i32
    %c0_i32_1 = arith.constant 0 : i32
    return %c0_i32, %c0_i32_0 : i32, i32
  }
  func.func @transform_8(%arg0: i32) -> (i32, i32) {
    %c0_i32 = arith.constant 0 : i32
    %c0_i32_0 = arith.constant 0 : i32
    return %arg0, %c0_i32 : i32, i32
  }
  func.func @transform_9(%arg0: i32) -> (i32, i32) {
    %c0_i32 = arith.constant 0 : i32
    %c0_i32_0 = arith.constant 0 : i32
    return %arg0, %c0_i32 : i32, i32
  }
}

</mosaic_0001>

<llo_original>
// kernel: tpu_custom_call.1
$region0: #{tpu_custom_call.1}
  #allocation0 [shape = 'u32[]', space=smem, size = 0x4, offset = 0x4, fixed_abs, tag = 'smem constant byte address 0x4 - core index']
  #allocation1 [shape = 'u32[72,128]{1,0:T(1,128)}', space=vmem, size = 0x9000, scoped, tag = 'internal scratch']
  %s0 = inlined_call_operand.vmem [shape: f32[8,33], index: 0, kind: input, shape index: {}]
  %s1 = inlined_call_operand.vmem [shape: bf16[33,256], index: 1, kind: input, shape index: {}]
  %s2 = inlined_call_operand.vmem [shape: f32[1,256], index: 2, kind: input, shape index: {}]
  %s3 = inlined_call_operand.hbm [shape: bf16[256,128], index: 3, kind: input, shape index: {}]
  %s4 = inlined_call_operand.vmem [shape: f32[1,128], index: 4, kind: input, shape index: {}]
  %s5 = inlined_call_operand.vmem [shape: bf16[128,8], index: 5, kind: input, shape index: {}]
  %s6 = inlined_call_operand.vmem [shape: f32[1,8], index: 6, kind: input, shape index: {}]
  %s7 = inlined_call_operand.vmem [shape: f32[8,8], index: 7, kind: input, shape index: {}]
  %s8 = inlined_call_operand.vmem [shape: f32[8,8], index: 8, kind: input, shape index: {}]
  %s9 = inlined_call_operand.hbm [shape: f32[8,8], index: 9, kind: output, shape index: {}]
  %s10 = sld [smem:[#allocation0]]
  $region50: #{tpu_custom_call.1} parent=0
    _
  %s12 = ssub.s32 1, %s10
  %s13 = scalar_select 0, %s12, %s10
  $region1: #{tpu_custom_call.1} parent=0
    #allocation2 [shape = 'u8[65536]{0}', space=vmem, size = 0x10000, scoped, tag = 'input window, operand 3, single buffered']
    #allocation3 [shape = 's32[1]{0}', space=sflag, size = 0x4, scoped, tag = 'scoped memory for tpu_custom_call.1']
    #allocation4 [shape = 's32[1]{0}', space=sflag, size = 0x4, scoped, tag = 'scoped memory for tpu_custom_call.1']
    #allocation5 [shape = 'u8[4096]{0}', space=vmem, size = 0x1000, scoped, tag = 'output window, operand 0, single buffered']
    %14 = vsyncpa [#allocation3], 0
    %15 = vsyncpa [#allocation4], 0
    // Predicated region
    $region2: #{tpu_custom_call.1} parent=1 // pred_check
      _
    $region3: #{tpu_custom_call.1} parent=1 // pred_check_branch
      %17 = sbr.rel (0) target = $region5
    $region4: #{tpu_custom_call.1} parent=1 // pred_region
      _
    $region5: #{tpu_custom_call.1} parent=1 // pred_fallthru
      _
    // Predicated region
    $region6: #{tpu_custom_call.1} parent=1 // pred_check
      _
    $region7: #{tpu_custom_call.1} parent=1 // pred_check_branch
      %19 = sbr.rel (0) target = $region9
    $region8: #{tpu_custom_call.1} parent=1 // pred_region
      _
    $region9: #{tpu_custom_call.1} parent=1 // pred_fallthru
      _
    // Predicated region
    $region10: #{tpu_custom_call.1} parent=1 // pred_check
      _
    $region11: #{tpu_custom_call.1} parent=1 // pred_check_branch
      %21 = sbr.rel (0) target = $region13
    $region12: #{tpu_custom_call.1} parent=1 // pred_region
      _
    $region13: #{tpu_custom_call.1} parent=1 // pred_fallthru
      _
    // Predicated region
    $region14: #{tpu_custom_call.1} parent=1 // pred_check
      _
    $region15: #{tpu_custom_call.1} parent=1 // pred_check_branch
      %23 = sbr.rel (0) target = $region17
    $region16: #{tpu_custom_call.1} parent=1 // pred_region
      %25 = vsyncadd [#allocation3], 0
      %s26 = sshll.u32 %s3, 4
      %s27 = int_to_ptr.hbm [resolvable:$true] %s26
      %s28 = sshll.u32 [#allocation2], 4
      %s29 = int_to_ptr.vmem [resolvable:$true] %s28
      %34 = dma.hbm_to_vmem [thread:$0]  %s27, 2048, %s29, [#allocation3], 64, 64, 4
    $region17: #{tpu_custom_call.1} parent=1 // pred_fallthru
      _
    // Predicated region
    $region18: #{tpu_custom_call.1} parent=1 // pred_check
      _
    $region19: #{tpu_custom_call.1} parent=1 // pred_check_branch
      %36 = sbr.rel (0) target = $region21
    $region20: #{tpu_custom_call.1} parent=1 // pred_region
      _
    $region21: #{tpu_custom_call.1} parent=1 // pred_fallthru
      _
    // Predicated region
    $region22: #{tpu_custom_call.1} parent=1 // pred_check
      _
    $region23: #{tpu_custom_call.1} parent=1 // pred_check_branch
      %38 = sbr.rel (0) target = $region25
    $region24: #{tpu_custom_call.1} parent=1 // pred_region
      _
    $region25: #{tpu_custom_call.1} parent=1 // pred_fallthru
      _
    // Predicated region
    $region26: #{tpu_custom_call.1} parent=1 // pred_check
      _
    $region27: #{tpu_custom_call.1} parent=1 // pred_check_branch
      %40 = sbr.rel (0) target = $region29
    $region28: #{tpu_custom_call.1} parent=1 // pred_region
      _
    $region29: #{tpu_custom_call.1} parent=1 // pred_fallthru
      _
    // Predicated region
    $region30: #{tpu_custom_call.1} parent=1 // pred_check
      _
    $region31: #{tpu_custom_call.1} parent=1 // pred_check_branch
      %42 = sbr.rel (0) target = $region33
    $region32: #{tpu_custom_call.1} parent=1 // pred_region
      _
    $region33: #{tpu_custom_call.1} parent=1 // pred_fallthru
      _
    // Predicated region
    $region34: #{tpu_custom_call.1} parent=1 // pred_check
      _
    $region35: #{tpu_custom_call.1} parent=1 // pred_check_branch
      %44 = sbr.rel (0) target = $region37
    $region36: #{tpu_custom_call.1} parent=1 // pred_region
      _
    $region37: #{tpu_custom_call.1} parent=1 // pred_fallthru
      _
    // Predicated region
    $region38: #{tpu_custom_call.1} parent=1 // pred_check
      _
    $region39: #{tpu_custom_call.1} parent=1 // pred_check_branch
      %46 = sbr.rel (0) target = $region41
    $region40: #{tpu_custom_call.1} parent=1 // pred_region
      %48 = dma.done [#allocation3], 2048
    $region41: #{tpu_custom_call.1} parent=1 // pred_fallthru
      _
    %v50 = vld [vmem:[%s0] sm:$0xff]
    %v51 = vpack.c.bf16 %v50, %v50
    %v52 = vld [vmem:[%s1] sm:$0xff]
    %v53 = vld [vmem:[%s1 + $0x8] sm:$0xff]
    %v54 = vld [vmem:[%s1 + $0x10] sm:$0xff]
    %v55 = vld [vmem:[%s1 + $0x18] sm:$0xff]
    %v56 = vld [vmem:[%s1 + $0x20] sm:$0x11]
    %v57 = vld [vmem:[%s2] sm:$0x3]
    %v59 = vperm.slane %v57, 0
    %v60 = vperm.slane %v57, 1
    %v68 = vunpack.c.l.b16 %v52
    %v69 = vunpack.c.h.b16 %v52
    %v70 = vunpack.c.l.b16 %v53
    %v71 = vunpack.c.h.b16 %v53
    %v72 = vunpack.c.l.b16 %v54
    %v73 = vunpack.c.h.b16 %v54
    %v74 = vunpack.c.l.b16 %v55
    %v75 = vunpack.c.h.b16 %v55
    %v76 = vunpack.c.l.b16 %v56
    %v77 = vunpack.c.h.b16 %v56
    %v78 = vpack.c.b16 %v70, %v68
    %v79 = vpack.c.b16 %v71, %v69
    %v80 = vpack.c.b16 %v74, %v72
    %v81 = vpack.c.b16 %v75, %v73
    %v82 = vpack.c.b16 %v76, %v76
    %v83 = vpack.c.b16 %v77, %v77
    %vm88 = vcmask 269312
    %v90 = vsel %vm88, %v51, 0
    %vm92 = vcmask 1040384
    %v93 = vsel 0, 4294967295, 65535
    %v94 = vsel %vm92, %v93, 0
    %v96 = vand.u32 %v82, %v94
    %v99 = vand.u32 %v83, %v94
    %101 = vmatpush.bf16.msra.mxu0 0
    %102 = vmatpush.bf16.msra.mxu0 0
    %103 = vmatpush.bf16.msra.mxu0 0
    %104 = vmatpush.bf16.msra.mxu0 0
    %105 = vmatpush.bf16.msra.mxu0 0
    %106 = vmatpush.bf16.msra.mxu0 %v96
    %107 = vmatpush.bf16.msra.mxu0 %v80
    %108 = vmatpush.bf16.msra.mxu0 %v78
    %109 = vmatmul.bf16.gmra.mxu0 %v90
    %v110 = vpop.f32.mrf.mxu0
    %v111 = vadd.f32 %v59, %v110
    %v112 = vpop.f32.mrf.mxu0
    %113 = vdwg.mxu0
    %114 = vmatpush.bf16.msra.mxu0 0
    %115 = vmatpush.bf16.msra.mxu0 0
    %116 = vmatpush.bf16.msra.mxu0 0
    %117 = vmatpush.bf16.msra.mxu0 0
    %118 = vmatpush.bf16.msra.mxu0 0
    %119 = vmatpush.bf16.msra.mxu0 %v99
    %120 = vmatpush.bf16.msra.mxu0 %v81
    %121 = vmatpush.bf16.msra.mxu0 %v79
    %122 = vmatmul.bf16.gmra.mxu0 %v90
    %v123 = vpop.f32.mrf.mxu0
    %v124 = vadd.f32 %v60, %v123
    %v125 = vpop.f32.mrf.mxu0
    %126 = vdwg.mxu0
    %v127 = vmax.f32 %v111, 0.0
    %v128 = vmax.f32 %v124, 0.0
    %v129 = vpack.c.bf16 %v127, %v127
    %v130 = vpack.c.bf16 %v128, %v128
    %v131 = vld [vmem:[#allocation2] sm:$0xf]
    %v132 = vld [vmem:[#allocation2 + $0x4] sm:$0xf]
    %v133 = vld [vmem:[#allocation2 + $0x8] sm:$0xf]
    %v134 = vld [vmem:[#allocation2 + $0xc] sm:$0xf]
    %v135 = vld [vmem:[#allocation2 + $0x10] sm:$0xf]
    %v136 = vld [vmem:[#allocation2 + $0x14] sm:$0xf]
    %v137 = vld [vmem:[#allocation2 + $0x18] sm:$0xf]
    %v138 = vld [vmem:[#allocation2 + $0x1c] sm:$0xf]
    %v139 = vld [vmem:[#allocation2 + $0x20] sm:$0xf]
    %v140 = vld [vmem:[#allocation2 + $0x24] sm:$0xf]
    %v141 = vld [vmem:[#allocation2 + $0x28] sm:$0xf]
    %v142 = vld [vmem:[#allocation2 + $0x2c] sm:$0xf]
    %v143 = vld [vmem:[#allocation2 + $0x30] sm:$0xf]
    %v144 = vld [vmem:[#allocation2 + $0x34] sm:$0xf]
    %v145 = vld [vmem:[#allocation2 + $0x38] sm:$0xf]
    %v146 = vld [vmem:[#allocation2 + $0x3c] sm:$0xf]
    %v147 = vld [vmem:[#allocation2 + $0x40] sm:$0xf]
    %v148 = vld [vmem:[#allocation2 + $0x44] sm:$0xf]
    %v149 = vld [vmem:[#allocation2 + $0x48] sm:$0xf]
    %v150 = vld [vmem:[#allocation2 + $0x4c] sm:$0xf]
    %v151 = vld [vmem:[#allocation2 + $0x50] sm:$0xf]
    %v152 = vld [vmem:[#allocation2 + $0x54] sm:$0xf]
    %v153 = vld [vmem:[#allocation2 + $0x58] sm:$0xf]
    %v154 = vld [vmem:[#allocation2 + $0x5c] sm:$0xf]
    %v155 = vld [vmem:[#allocation2 + $0x60] sm:$0xf]
    %v156 = vld [vmem:[#allocation2 + $0x64] sm:$0xf]
    %v157 = vld [vmem:[#allocation2 + $0x68] sm:$0xf]
    %v158 = vld [vmem:[#allocation2 + $0x6c] sm:$0xf]
    %v159 = vld [vmem:[#allocation2 + $0x70] sm:$0xf]
    %v160 = vld [vmem:[#allocation2 + $0x74] sm:$0xf]
    %v161 = vld [vmem:[#allocation2 + $0x78] sm:$0xf]
    %v162 = vld [vmem:[#allocation2 + $0x7c] sm:$0xf]
    %v163 = vld [vmem:[%s4] sm:$0x1]
    %v165 = vperm.slane %v163, 0
    %v199 = vunpack.c.l.b16 %v131
    %v200 = vunpack.c.l.b16 %v132
    %v201 = vunpack.c.l.b16 %v133
    %v202 = vunpack.c.l.b16 %v134
    %v203 = vunpack.c.l.b16 %v135
    %v204 = vunpack.c.l.b16 %v136
    %v205 = vunpack.c.l.b16 %v137
    %v206 = vunpack.c.l.b16 %v138
    %v207 = vunpack.c.l.b16 %v139
    %v208 = vunpack.c.l.b16 %v140
    %v209 = vunpack.c.l.b16 %v141
    %v210 = vunpack.c.l.b16 %v142
    %v211 = vunpack.c.l.b16 %v143
    %v212 = vunpack.c.l.b16 %v144
    %v213 = vunpack.c.l.b16 %v145
    %v214 = vunpack.c.l.b16 %v146
    %v215 = vunpack.c.l.b16 %v147
    %v216 = vunpack.c.l.b16 %v148
    %v217 = vunpack.c.l.b16 %v149
    %v218 = vunpack.c.l.b16 %v150
    %v219 = vunpack.c.l.b16 %v151
    %v220 = vunpack.c.l.b16 %v152
    %v221 = vunpack.c.l.b16 %v153
    %v222 = vunpack.c.l.b16 %v154
    %v223 = vunpack.c.l.b16 %v155
    %v224 = vunpack.c.l.b16 %v156
    %v225 = vunpack.c.l.b16 %v157
    %v226 = vunpack.c.l.b16 %v158
    %v227 = vunpack.c.l.b16 %v159
    %v228 = vunpack.c.l.b16 %v160
    %v229 = vunpack.c.l.b16 %v161
    %v230 = vunpack.c.l.b16 %v162
    %v231 = vpack.c.b16 %v200, %v199
    %v232 = vpack.c.b16 %v202, %v201
    %v233 = vpack.c.b16 %v204, %v203
    %v234 = vpack.c.b16 %v206, %v205
    %v235 = vpack.c.b16 %v208, %v207
    %v236 = vpack.c.b16 %v210, %v209
    %v237 = vpack.c.b16 %v212, %v211
    %v238 = vpack.c.b16 %v214, %v213
    %v239 = vpack.c.b16 %v216, %v215
    %v240 = vpack.c.b16 %v218, %v217
    %v241 = vpack.c.b16 %v220, %v219
    %v242 = vpack.c.b16 %v222, %v221
    %v243 = vpack.c.b16 %v224, %v223
    %v244 = vpack.c.b16 %v226, %v225
    %v245 = vpack.c.b16 %v228, %v227
    %v246 = vpack.c.b16 %v230, %v229
    %263 = vmatpush.bf16.msra.mxu0 %v238
    %264 = vmatpush.bf16.msra.mxu0 %v237
    %265 = vmatpush.bf16.msra.mxu0 %v236
    %266 = vmatpush.bf16.msra.mxu0 %v235
    %267 = vmatpush.bf16.msra.mxu0 %v234
    %268 = vmatpush.bf16.msra.mxu0 %v233
    %269 = vmatpush.bf16.msra.mxu0 %v232
    %270 = vmatpush.bf16.msra.mxu0 %v231
    %271 = vmatmul.bf16.gmra.mxu0 %v129
    %v272 = vpop.f32.mrf.mxu0
    %v273 = vadd.f32 %v165, %v272
    %v274 = vpop.f32.mrf.mxu0
    %275 = vdwg.mxu0
    %276 = vmatpush.bf16.msra.mxu0 %v246
    %277 = vmatpush.bf16.msra.mxu0 %v245
    %278 = vmatpush.bf16.msra.mxu0 %v244
    %279 = vmatpush.bf16.msra.mxu0 %v243
    %280 = vmatpush.bf16.msra.mxu0 %v242
    %281 = vmatpush.bf16.msra.mxu0 %v241
    %282 = vmatpush.bf16.msra.mxu0 %v240
    %283 = vmatpush.bf16.msra.mxu0 %v239
    %284 = vmatmul.bf16.gmra.mxu0 %v130
    %v285 = vpop.f32.mrf.mxu0
    %v286 = vadd.f32 %v273, %v285
    %v287 = vpop.f32.mrf.mxu0
    %288 = vdwg.mxu0
    %v289 = vmax.f32 %v286, 0.0
    %v290 = vpack.c.bf16 %v289, %v289
    %v291 = vld [vmem:[%s5] sm:$0xf]
    %v292 = vld [vmem:[%s5 + $0x4] sm:$0xf]
    %v293 = vld [vmem:[%s5 + $0x8] sm:$0xf]
    %v294 = vld [vmem:[%s5 + $0xc] sm:$0xf]
    %v295 = vld [vmem:[%s5 + $0x10] sm:$0xf]
    %v296 = vld [vmem:[%s5 + $0x14] sm:$0xf]
    %v297 = vld [vmem:[%s5 + $0x18] sm:$0xf]
    %v298 = vld [vmem:[%s5 + $0x1c] sm:$0xf]
    %v299 = vld [vmem:[%s5 + $0x20] sm:$0xf]
    %v300 = vld [vmem:[%s5 + $0x24] sm:$0xf]
    %v301 = vld [vmem:[%s5 + $0x28] sm:$0xf]
    %v302 = vld [vmem:[%s5 + $0x2c] sm:$0xf]
    %v303 = vld [vmem:[%s5 + $0x30] sm:$0xf]
    %v304 = vld [vmem:[%s5 + $0x34] sm:$0xf]
    %v305 = vld [vmem:[%s5 + $0x38] sm:$0xf]
    %v306 = vld [vmem:[%s5 + $0x3c] sm:$0xf]
    %v307 = vld [vmem:[%s6] sm:$0x1]
    %v309 = vperm.slane %v307, 0
    %v327 = vunpack.c.l.b16 %v291
    %v328 = vunpack.c.l.b16 %v292
    %v329 = vunpack.c.l.b16 %v293
    %v330 = vunpack.c.l.b16 %v294
    %v331 = vunpack.c.l.b16 %v295
    %v332 = vunpack.c.l.b16 %v296
    %v333 = vunpack.c.l.b16 %v297
    %v334 = vunpack.c.l.b16 %v298
    %v335 = vunpack.c.l.b16 %v299
    %v336 = vunpack.c.l.b16 %v300
    %v337 = vunpack.c.l.b16 %v301
    %v338 = vunpack.c.l.b16 %v302
    %v339 = vunpack.c.l.b16 %v303
    %v340 = vunpack.c.l.b16 %v304
    %v341 = vunpack.c.l.b16 %v305
    %v342 = vunpack.c.l.b16 %v306
    %v343 = vpack.c.b16 %v328, %v327
    %v344 = vpack.c.b16 %v330, %v329
    %v345 = vpack.c.b16 %v332, %v331
    %v346 = vpack.c.b16 %v334, %v333
    %v347 = vpack.c.b16 %v336, %v335
    %v348 = vpack.c.b16 %v338, %v337
    %v349 = vpack.c.b16 %v340, %v339
    %v350 = vpack.c.b16 %v342, %v341
    %359 = vmatpush.bf16.msra.mxu0 %v350
    %360 = vmatpush.bf16.msra.mxu0 %v349
    %361 = vmatpush.bf16.msra.mxu0 %v348
    %362 = vmatpush.bf16.msra.mxu0 %v347
    %363 = vmatpush.bf16.msra.mxu0 %v346
    %364 = vmatpush.bf16.msra.mxu0 %v345
    %365 = vmatpush.bf16.msra.mxu0 %v344
    %366 = vmatpush.bf16.msra.mxu0 %v343
    %367 = vmatmul.bf16.gmra.mxu0 %v290
    %v368 = vpop.f32.mrf.mxu0
    %v369 = vadd.f32 %v309, %v368
    %v370 = vpop.f32.mrf.mxu0
    %371 = vdwg.mxu0
    %v372 = vmax.f32 %v369, 0.0
    %v373 = vtanh.pop %v372
    %v374 = vld [vmem:[%s7] sm:$0xff]
    %v375 = vld [vmem:[%s8] sm:$0xff]
    %v376 = vperm.slane %v374, 0
    %v377 = vmul.f32 %v376, %v375
    %v378 = vadd.f32 %v373, %v377
    %v379 = vsub.f32 %v378, %v373
    %v380 = vmul.f32 %v379, %v379
    %v381 = vmul.f32 %v380, -0.5
    %v382 = vperm.slane %v374, 1
    %v383 = vmul.f32 %v381, %v382
    %v384 = vperm.slane %v374, 2
    %v385 = vadd.f32 %v383, %v384
    %vm386 = vcmask 64512
    %v387 = vsel %vm386, %v385, 0.0
    %388 = vadd.xlane.f32.xlu0 %v387
    %v389 = vpop.xlane.xlu0 %388
    %390 = vst.msk [vmem:[#allocation5] sm:$0xff] %vm386, %v378
    %vm391 = vcmask 39968
    %392 = vst.msk [vmem:[#allocation5] sm:$0xff] %vm391, %v389
    %v393 = vperm.slane %v374, 3
    %395 = vrot.lane.b32.xlu0 %v393, 5
    %v396 = vpop.permute.xlu0 %395
    %vm398 = vcmask 48168
    %399 = vst.msk [vmem:[#allocation5] sm:$0xff] %vm398, %v396
    // Predicated region
    $region42: #{tpu_custom_call.1} parent=1 // pred_check
      _
    $region43: #{tpu_custom_call.1} parent=1 // pred_check_branch
      %401 = sbr.rel (0) target = $region45
    $region44: #{tpu_custom_call.1} parent=1 // pred_region
      %403 = vsyncadd [#allocation4], 0
      %s405 = sshll.u32 [#allocation5], 4
      %s406 = int_to_ptr.vmem [resolvable:$true] %s405
      %s407 = sshll.u32 %s9, 4
      %s408 = int_to_ptr.hbm [resolvable:$true] %s407
      %410 = dma.vmem_to_hbm [thread:$0]  %s406, 128, %s408, [#allocation4]
    $region45: #{tpu_custom_call.1} parent=1 // pred_fallthru
      _
    // Predicated region
    $region46: #{tpu_custom_call.1} parent=1 // pred_check
      _
    $region47: #{tpu_custom_call.1} parent=1 // pred_check_branch
      %412 = sbr.rel (0) target = $region49
    $region48: #{tpu_custom_call.1} parent=1 // pred_region
      %414 = dma.done [#allocation4], 128
    $region49: #{tpu_custom_call.1} parent=1 // pred_fallthru
      _
    %415 = vsyncpa [#allocation3], 1
    %416 = vsyncpa [#allocation4], 1

</llo_original>
